<compile_context>
chip_gen: v5e
topology: v5e:2x2
jax: 0.10.0
libtpu: 0.0.40
codegen_flags: <defaults>
</compile_context>

<pallas_src>
import functools

import jax
import jax.numpy as jnp
from jax.experimental import pallas as pl
from jax.experimental.pallas import tpu as pltpu


def _linear_kernel(z_ref, w_ref, b_ref, o_ref):
    # z_ref: (tm, c_z)  w_ref: (c_z, num_bins)  b_ref: (1, num_bins)
    acc = jnp.dot(z_ref[...], w_ref[...], preferred_element_type=jnp.float32)
    o_ref[...] = (acc + b_ref[...].astype(jnp.float32)).astype(o_ref.dtype)


@functools.partial(jax.jit, static_argnames=("tm",))
def tm_score_head_forward(z, weight, bias, *, tm=2048):
    """z: [*, S, S, c_z] -> logits: [*, S, S, num_bins].

    weight: [c_z, num_bins] (already transposed vs. torch's [out, in]),
    bias:   [num_bins].
    tm:     row tile (must be a multiple of 8); large by default since the
            kernel is memory bound.
    """
    *lead, s1, s2, c_z = z.shape
    num_bins = weight.shape[1]

    rows = 1
    for d in (*lead, s1, s2):
        rows *= d

    z2d = z.reshape(rows, c_z)
    b2d = bias.reshape(1, num_bins)

    # Row tile: the second-to-last block dim must be a multiple of 8 OR equal
    # to the full array dim.  Small inputs -> one full-extent block; otherwise
    # a large (multiple-of-8) tile with the ragged last block masked by Pallas.
    if rows <= tm:
        tm_eff = rows
    else:
        tm_eff = tm

    grid = pl.cdiv(rows, tm_eff)

    # Scoped-VMEM budget: double-buffered z + out tiles, resident weight/bias,
    # plus headroom.  Cap keeps it safe on v5e (16 MiB scoped default) and v7x
    # (64 MiB physical per chip, 2 TCs).
    in_itemsize = max(jnp.dtype(z.dtype).itemsize, 2)
    w_itemsize = jnp.dtype(weight.dtype).itemsize
    vmem_needed = (
        2 * tm_eff * c_z * in_itemsize          # double-buffered z tile
        + 2 * tm_eff * num_bins * in_itemsize   # double-buffered out tile
        + 2 * (c_z * num_bins + num_bins) * w_itemsize  # weight + bias
        + 2 * tm_eff * num_bins * 4             # f32 accumulator slack
    )
    vmem_limit = int(min(max(vmem_needed + (4 << 20), 16 << 20), 48 << 20))

    out2d = pl.pallas_call(
        _linear_kernel,
        out_shape=jax.ShapeDtypeStruct((rows, num_bins), z.dtype),
        grid_spec=pltpu.PrefetchScalarGridSpec(
            num_scalar_prefetch=0,
            grid=(grid,),
            in_specs=[
                pl.BlockSpec((tm_eff, c_z), lambda i: (i, 0)),          # z tile
                pl.BlockSpec((c_z, num_bins), lambda i: (0, 0)),        # resident weight
                pl.BlockSpec((1, num_bins), lambda i: (0, 0)),          # resident bias row
            ],
            out_specs=pl.BlockSpec((tm_eff, num_bins), lambda i: (i, 0)),
        ),
        compiler_params=pltpu.CompilerParams(
            dimension_semantics=("parallel",),
            vmem_limit_bytes=vmem_limit,
        ),
    )(z2d, weight, b2d)

    return out2d.reshape(*lead, s1, s2, num_bins)


if __name__ == "__main__":
    # Module config (small, consistent with forward semantics).
    batch, seq_len, c_z, num_bins = 2, 8, 32, 64

    key = jax.random.PRNGKey(0)
    kz, kw, kb = jax.random.split(key, 3)

    z = jax.random.normal(kz, (batch, seq_len, seq_len, c_z), dtype=jnp.float32)

    # Deterministic parameter init. Note: OpenFold's Linear(init='final') zeroes
    # the weights/bias; we use small deterministic random values so the kernel
    # exercises a non-trivial matmul, which is semantically identical modulo init.
    weight = 0.02 * jax.random.normal(kw, (c_z, num_bins), dtype=jnp.float32)
    bias = 0.02 * jax.random.normal(kb, (num_bins,), dtype=jnp.float32)

    logits = tm_score_head_forward(z, weight, bias)
    logits = jax.block_until_ready(logits)

    # Sanity check against plain-JAX reference.
    ref = jnp.einsum("bijc,cn->bijn", z, weight) + bias
    assert logits.shape == (batch, seq_len, seq_len, num_bins)
    assert jnp.allclose(logits, ref, atol=1e-5, rtol=1e-5)

    print("KERNEL_OK")
</pallas_src>

<mosaic_0001>
module attributes {stable_mosaic.version = 11 : i64} {
  func.func @_linear_kernel(%arg0: i32, %arg1: memref<128x32xf32, #tpu.memory_space<vmem>>, %arg2: memref<32x64xf32, #tpu.memory_space<vmem>>, %arg3: memref<1x64xf32, #tpu.memory_space<vmem>>, %arg4: memref<128x64xf32, #tpu.memory_space<vmem>>) attributes {dimension_semantics = [#tpu.dimension_semantics<parallel>], iteration_bounds = array<i64: 1>, scalar_prefetch = 0 : i64, scratch_operands = 0 : i64, tpu.core_type = #tpu.core_type<tc>, window_params = [{transform_indices = @transform_0, window_bounds = array<i64: 128, 32>}, {pipeline_mode = #tpu.pipeline_mode<synchronous>, transform_indices = @transform_1, window_bounds = array<i64: 32, 64>}, {pipeline_mode = #tpu.pipeline_mode<synchronous>, transform_indices = @transform_2, window_bounds = array<i64: 1, 64>}, {transform_indices = @transform_3, window_bounds = array<i64: 128, 64>}]} {
    %c0 = arith.constant 0 : index
    %c0_0 = arith.constant 0 : index
    %0 = vector.load %arg1[%c0, %c0_0] : memref<128x32xf32, #tpu.memory_space<vmem>>, vector<128x32xf32>
    %c0_1 = arith.constant 0 : index
    %c0_2 = arith.constant 0 : index
    %1 = vector.load %arg2[%c0_1, %c0_2] : memref<32x64xf32, #tpu.memory_space<vmem>>, vector<32x64xf32>
    %cst = arith.constant dense<0.000000e+00> : vector<128x64xf32>
    %2 = tpu.matmul %0, %1, %cst {dimension_numbers = #tpu.dot_dimension_numbers<[1], [0], [0], [1], [0, 0, 1, 1], [], []>} : vector<128x32xf32>, vector<32x64xf32>, vector<128x64xf32> -> vector<128x64xf32>
    %c0_3 = arith.constant 0 : index
    %c0_4 = arith.constant 0 : index
    %3 = vector.load %arg3[%c0_3, %c0_4] : memref<1x64xf32, #tpu.memory_space<vmem>>, vector<1x64xf32>
    %4 = vector.broadcast %3 : vector<1x64xf32> to vector<128x64xf32>
    %5 = arith.addf %2, %4 : vector<128x64xf32>
    %c0_5 = arith.constant 0 : index
    %c0_6 = arith.constant 0 : index
    %6 = vector.load %arg4[%c0_5, %c0_6] : memref<128x64xf32, #tpu.memory_space<vmem>>, vector<128x64xf32>
    tpu.vector_store %arg4[%c0_5, %c0_6], %5 {strides = array<i32>} : memref<128x64xf32, #tpu.memory_space<vmem>>, vector<128x64xf32>,
    return
  }
  func.func @transform_0(%arg0: i32) -> (i32, i32) {
    %c0_i32 = arith.constant 0 : i32
    %c0_i32_0 = arith.constant 0 : i32
    return %arg0, %c0_i32 : i32, i32
  }
  func.func @transform_1(%arg0: i32) -> (i32, i32) {
    %c0_i32 = arith.constant 0 : i32
    %c0_i32_0 = arith.constant 0 : i32
    %c0_i32_1 = arith.constant 0 : i32
    return %c0_i32, %c0_i32_0 : i32, i32
  }
  func.func @transform_2(%arg0: i32) -> (i32, i32) {
    %c0_i32 = arith.constant 0 : i32
    %c0_i32_0 = arith.constant 0 : i32
    %c0_i32_1 = arith.constant 0 : i32
    return %c0_i32, %c0_i32_0 : i32, i32
  }
  func.func @transform_3(%arg0: i32) -> (i32, i32) {
    %c0_i32 = arith.constant 0 : i32
    %c0_i32_0 = arith.constant 0 : i32
    return %arg0, %c0_i32 : i32, i32
  }
}

</mosaic_0001>

<llo_original>
// kernel: tm_score_head_forward.1
$region0: #{tm_score_head_forward.1}
  #allocation0 [shape = 'u32[]', space=smem, size = 0x4, offset = 0x4, fixed_abs, tag = 'smem constant byte address 0x4 - core index']
  #allocation1 [shape = 'u32[72,128]{1,0:T(1,128)}', space=vmem, size = 0x9000, scoped, tag = 'internal scratch']
  %s0 = inlined_call_operand.hbm [shape: f32[128,32], index: 0, kind: input, shape index: {}]
  %s1 = inlined_call_operand.hbm [shape: f32[32,64], index: 1, kind: input, shape index: {}]
  %s2 = inlined_call_operand.vmem [shape: f32[1,64], index: 2, kind: input, shape index: {}]
  %s3 = inlined_call_operand.hbm [shape: f32[128,64], index: 3, kind: output, shape index: {}]
  %s4 = sld [smem:[#allocation0]]
  $region30: #{tm_score_head_forward.1} parent=0
    _
  %s6 = ssub.s32 1, %s4
  %s7 = scalar_select 0, %s6, %s4
  $region1: #{tm_score_head_forward.1} parent=0
    #allocation2 [shape = 'u8[65536]{0}', space=vmem, size = 0x10000, scoped, tag = 'input window, operand 0, single buffered']
    #allocation3 [shape = 's32[1]{0}', space=sflag, size = 0x4, scoped, tag = 'scoped memory for tm_score_head_forward.1']
    #allocation4 [shape = 's32[1]{0}', space=sflag, size = 0x4, scoped, tag = 'scoped memory for tm_score_head_forward.1']
    #allocation5 [shape = 'u8[16384]{0}', space=vmem, size = 0x4000, scoped, tag = 'input window, operand 1, single buffered']
    #allocation6 [shape = 's32[1]{0}', space=sflag, size = 0x4, scoped, tag = 'scoped memory for tm_score_head_forward.1']
    #allocation7 [shape = 'u8[65536]{0}', space=vmem, size = 0x10000, scoped, tag = 'output window, operand 0, single buffered']
    %8 = vsyncpa [#allocation3], 0
    %9 = vsyncpa [#allocation6], 0
    %10 = vsyncpa [#allocation4], 0
    // Predicated region
    $region2: #{tm_score_head_forward.1} parent=1 // pred_check
      _
    $region3: #{tm_score_head_forward.1} parent=1 // pred_check_branch
      %12 = sbr.rel (0) target = $region5
    $region4: #{tm_score_head_forward.1} parent=1 // pred_region
      %14 = vsyncadd [#allocation3], 0
      %s15 = sshll.u32 %s0, 4
      %s16 = int_to_ptr.hbm [resolvable:$true] %s15
      %s17 = sshll.u32 [#allocation2], 4
      %s18 = int_to_ptr.vmem [resolvable:$true] %s17
      %23 = dma.hbm_to_vmem [thread:$0]  %s16, 2048, %s18, [#allocation3], 128, 128, 8
    $region5: #{tm_score_head_forward.1} parent=1 // pred_fallthru
      _
    // Predicated region
    $region6: #{tm_score_head_forward.1} parent=1 // pred_check
      _
    $region7: #{tm_score_head_forward.1} parent=1 // pred_check_branch
      %25 = sbr.rel (0) target = $region9
    $region8: #{tm_score_head_forward.1} parent=1 // pred_region
      %27 = vsyncadd [#allocation6], 0
      %s28 = sshll.u32 %s1, 4
      %s29 = int_to_ptr.hbm [resolvable:$true] %s28
      %s30 = sshll.u32 [#allocation5], 4
      %s31 = int_to_ptr.vmem [resolvable:$true] %s30
      %36 = dma.hbm_to_vmem [thread:$0]  %s29, 512, %s31, [#allocation6], 128, 128, 8
    $region9: #{tm_score_head_forward.1} parent=1 // pred_fallthru
      _
    // Predicated region
    $region10: #{tm_score_head_forward.1} parent=1 // pred_check
      _
    $region11: #{tm_score_head_forward.1} parent=1 // pred_check_branch
      %38 = sbr.rel (0) target = $region13
    $region12: #{tm_score_head_forward.1} parent=1 // pred_region
      _
    $region13: #{tm_score_head_forward.1} parent=1 // pred_fallthru
      _
    // Predicated region
    $region14: #{tm_score_head_forward.1} parent=1 // pred_check
      _
    $region15: #{tm_score_head_forward.1} parent=1 // pred_check_branch
      %40 = sbr.rel (0) target = $region17
    $region16: #{tm_score_head_forward.1} parent=1 // pred_region
      %42 = dma.done [#allocation3], 2048
    $region17: #{tm_score_head_forward.1} parent=1 // pred_fallthru
      _
    // Predicated region
    $region18: #{tm_score_head_forward.1} parent=1 // pred_check
      _
    $region19: #{tm_score_head_forward.1} parent=1 // pred_check_branch
      %44 = sbr.rel (0) target = $region21
    $region20: #{tm_score_head_forward.1} parent=1 // pred_region
      %46 = dma.done [#allocation6], 512
    $region21: #{tm_score_head_forward.1} parent=1 // pred_fallthru
      _
    %v47 = vld [vmem:[#allocation2] sm:$0xff]
    %v48 = vld [vmem:[#allocation2 + $0x8] sm:$0xff]
    %v49 = vld [vmem:[#allocation2 + $0x10] sm:$0xff]
    %v50 = vld [vmem:[#allocation2 + $0x18] sm:$0xff]
    %v51 = vld [vmem:[#allocation2 + $0x20] sm:$0xff]
    %v52 = vld [vmem:[#allocation2 + $0x28] sm:$0xff]
    %v53 = vld [vmem:[#allocation2 + $0x30] sm:$0xff]
    %v54 = vld [vmem:[#allocation2 + $0x38] sm:$0xff]
    %v55 = vld [vmem:[#allocation2 + $0x40] sm:$0xff]
    %v56 = vld [vmem:[#allocation2 + $0x48] sm:$0xff]
    %v57 = vld [vmem:[#allocation2 + $0x50] sm:$0xff]
    %v58 = vld [vmem:[#allocation2 + $0x58] sm:$0xff]
    %v59 = vld [vmem:[#allocation2 + $0x60] sm:$0xff]
    %v60 = vld [vmem:[#allocation2 + $0x68] sm:$0xff]
    %v61 = vld [vmem:[#allocation2 + $0x70] sm:$0xff]
    %v62 = vld [vmem:[#allocation2 + $0x78] sm:$0xff]
    %v63 = vld [vmem:[#allocation5] sm:$0xff]
    %v64 = vld [vmem:[#allocation5 + $0x8] sm:$0xff]
    %v65 = vld [vmem:[#allocation5 + $0x10] sm:$0xff]
    %v66 = vld [vmem:[#allocation5 + $0x18] sm:$0xff]
    %v67 = vld [vmem:[%s2] sm:$0x1]
    %v69 = vperm.slane %v67, 0
    %vm71 = vcmask 261120
    %v73 = vsel %vm71, %v47, 0
    %v76 = vsel %vm71, %v48, 0
    %v79 = vsel %vm71, %v49, 0
    %v82 = vsel %vm71, %v50, 0
    %v85 = vsel %vm71, %v51, 0
    %v88 = vsel %vm71, %v52, 0
    %v91 = vsel %vm71, %v53, 0
    %v94 = vsel %vm71, %v54, 0
    %v97 = vsel %vm71, %v55, 0
    %v100 = vsel %vm71, %v56, 0
    %v103 = vsel %vm71, %v57, 0
    %v106 = vsel %vm71, %v58, 0
    %v109 = vsel %vm71, %v59, 0
    %v112 = vsel %vm71, %v60, 0
    %v115 = vsel %vm71, %v61, 0
    %v118 = vsel %vm71, %v62, 0
    %120 = vmatpush.msra.mxu0 0.0
    %121 = vmatpush.msra.mxu0 0.0
    %122 = vmatpush.msra.mxu0 0.0
    %123 = vmatpush.msra.mxu0 0.0
    %124 = vmatpush.msra.mxu0 0.0
    %125 = vmatpush.msra.mxu0 0.0
    %126 = vmatpush.msra.mxu0 0.0
    %127 = vmatpush.msra.mxu0 0.0
    %128 = vmatpush.msra.mxu0 0.0
    %129 = vmatpush.msra.mxu0 0.0
    %130 = vmatpush.msra.mxu0 0.0
    %131 = vmatpush.msra.mxu0 0.0
    %132 = vmatpush.msra.mxu0 %v66
    %133 = vmatpush.msra.mxu0 %v65
    %134 = vmatpush.msra.mxu0 %v64
    %135 = vmatpush.msra.mxu0 %v63
    %136 = vmatmul.f32.gmra.mxu0 %v73
    %v137 = vpop.f32.mrf.mxu0
    %v138 = vadd.f32 %v69, %v137
    %139 = vmatmul.f32.gmra.mxu0 %v76
    %v140 = vpop.f32.mrf.mxu0
    %v141 = vadd.f32 %v69, %v140
    %142 = vmatmul.f32.gmra.mxu0 %v79
    %v143 = vpop.f32.mrf.mxu0
    %v144 = vadd.f32 %v69, %v143
    %145 = vmatmul.f32.gmra.mxu0 %v82
    %v146 = vpop.f32.mrf.mxu0
    %v147 = vadd.f32 %v69, %v146
    %148 = vmatmul.f32.gmra.mxu0 %v85
    %v149 = vpop.f32.mrf.mxu0
    %v150 = vadd.f32 %v69, %v149
    %151 = vmatmul.f32.gmra.mxu0 %v88
    %v152 = vpop.f32.mrf.mxu0
    %v153 = vadd.f32 %v69, %v152
    %154 = vmatmul.f32.gmra.mxu0 %v91
    %v155 = vpop.f32.mrf.mxu0
    %v156 = vadd.f32 %v69, %v155
    %157 = vmatmul.f32.gmra.mxu0 %v94
    %v158 = vpop.f32.mrf.mxu0
    %v159 = vadd.f32 %v69, %v158
    %160 = vmatmul.f32.gmra.mxu0 %v97
    %v161 = vpop.f32.mrf.mxu0
    %v162 = vadd.f32 %v69, %v161
    %163 = vmatmul.f32.gmra.mxu0 %v100
    %v164 = vpop.f32.mrf.mxu0
    %v165 = vadd.f32 %v69, %v164
    %166 = vmatmul.f32.gmra.mxu0 %v103
    %v167 = vpop.f32.mrf.mxu0
    %v168 = vadd.f32 %v69, %v167
    %169 = vmatmul.f32.gmra.mxu0 %v106
    %v170 = vpop.f32.mrf.mxu0
    %v171 = vadd.f32 %v69, %v170
    %172 = vmatmul.f32.gmra.mxu0 %v109
    %v173 = vpop.f32.mrf.mxu0
    %v174 = vadd.f32 %v69, %v173
    %175 = vmatmul.f32.gmra.mxu0 %v112
    %v176 = vpop.f32.mrf.mxu0
    %v177 = vadd.f32 %v69, %v176
    %178 = vmatmul.f32.gmra.mxu0 %v115
    %v179 = vpop.f32.mrf.mxu0
    %v180 = vadd.f32 %v69, %v179
    %181 = vmatmul.f32.gmra.mxu0 %v118
    %v182 = vpop.f32.mrf.mxu0
    %v183 = vadd.f32 %v69, %v182
    %184 = vdwg.mxu0
    %vm185 = vcmask 523264
    %186 = vst.msk [vmem:[#allocation7] sm:$0xff] %vm185, %v138
    %187 = vst.msk [vmem:[#allocation7 + $0x8] sm:$0xff] %vm185, %v141
    %188 = vst.msk [vmem:[#allocation7 + $0x10] sm:$0xff] %vm185, %v144
    %189 = vst.msk [vmem:[#allocation7 + $0x18] sm:$0xff] %vm185, %v147
    %190 = vst.msk [vmem:[#allocation7 + $0x20] sm:$0xff] %vm185, %v150
    %191 = vst.msk [vmem:[#allocation7 + $0x28] sm:$0xff] %vm185, %v153
    %192 = vst.msk [vmem:[#allocation7 + $0x30] sm:$0xff] %vm185, %v156
    %193 = vst.msk [vmem:[#allocation7 + $0x38] sm:$0xff] %vm185, %v159
    %194 = vst.msk [vmem:[#allocation7 + $0x40] sm:$0xff] %vm185, %v162
    %195 = vst.msk [vmem:[#allocation7 + $0x48] sm:$0xff] %vm185, %v165
    %196 = vst.msk [vmem:[#allocation7 + $0x50] sm:$0xff] %vm185, %v168
    %197 = vst.msk [vmem:[#allocation7 + $0x58] sm:$0xff] %vm185, %v171
    %198 = vst.msk [vmem:[#allocation7 + $0x60] sm:$0xff] %vm185, %v174
    %199 = vst.msk [vmem:[#allocation7 + $0x68] sm:$0xff] %vm185, %v177
    %200 = vst.msk [vmem:[#allocation7 + $0x70] sm:$0xff] %vm185, %v180
    %201 = vst.msk [vmem:[#allocation7 + $0x78] sm:$0xff] %vm185, %v183
    // Predicated region
    $region22: #{tm_score_head_forward.1} parent=1 // pred_check
      _
    $region23: #{tm_score_head_forward.1} parent=1 // pred_check_branch
      %203 = sbr.rel (0) target = $region25
    $region24: #{tm_score_head_forward.1} parent=1 // pred_region
      %205 = vsyncadd [#allocation4], 0
      %s206 = sshll.u32 [#allocation7], 4
      %s207 = int_to_ptr.vmem [resolvable:$true] %s206
      %s208 = sshll.u32 %s3, 4
      %s209 = int_to_ptr.hbm [resolvable:$true] %s208
      %214 = dma.vmem_to_hbm [thread:$0]  %s207, 2048, %s209, [#allocation4], 128, 128, 8
    $region25: #{tm_score_head_forward.1} parent=1 // pred_fallthru
      _
    // Predicated region
    $region26: #{tm_score_head_forward.1} parent=1 // pred_check
      _
    $region27: #{tm_score_head_forward.1} parent=1 // pred_check_branch
      %216 = sbr.rel (0) target = $region29
    $region28: #{tm_score_head_forward.1} parent=1 // pred_region
      %218 = dma.done [#allocation4], 2048
    $region29: #{tm_score_head_forward.1} parent=1 // pred_fallthru
      _
    %219 = vsyncpa [#allocation3], 1
    %220 = vsyncpa [#allocation6], 1
    %221 = vsyncpa [#allocation4], 1

</llo_original>
